<compile_context>
chip_gen: v7x
topology: tpu7x:2x2x1
jax: 0.10.0
libtpu: 0.0.40
codegen_flags: <defaults>
</compile_context>

<pallas_src>
import numpy as np
import jax
import jax.numpy as jnp
from jax.experimental import pallas as pl
from jax.experimental.pallas import tpu as pltpu


def decoding_layer(x, p):
    """One DecodingLayer forward. x: (B, T, C) float32. Returns (h, y) with
    h: (B, T, C)   (bidirectional LSTM output)
    y: (B, T-1, C) (Conv1d(kernel=2) output)."""
    B, T, C = x.shape
    H = C // 2
    G = 4 * H          # gates per direction
    G2 = 8 * H         # both directions fused

    # ---------------- Kernel A: LayerNorm + fused input projection ----------------
    def ln_proj_kernel(x_ref, lnw_ref, lnb_ref, wih_ref, b_ref, xg_ref):
        xb = x_ref[0]                                    # (T, C)
        mean = jnp.mean(xb)
        var = jnp.mean((xb - mean) ** 2)
        xn = (xb - mean) * jax.lax.rsqrt(var + 1e-5)
        xn = xn * lnw_ref[...] + lnb_ref[...]
        # single (T, C) @ (C, 8H) matmul covers both LSTM directions' gates
        xg_ref[0] = (jnp.dot(xn, wih_ref[...], preferred_element_type=jnp.float32)
                     + b_ref[...]).astype(xg_ref.dtype)

    bytes_a = 4 * (T * C * 3 + C * G2 + G2 + T * G2)
    vmem_a = int(min(max(4 * bytes_a + (8 << 20), 32 << 20), 64 << 20))

    xg = pl.pallas_call(
        ln_proj_kernel,
        out_shape=jax.ShapeDtypeStruct((B, T, G2), jnp.float32),
        grid=(B,),
        in_specs=[
            pl.BlockSpec((1, T, C), lambda b: (b, 0, 0)),     # x
            pl.BlockSpec((T, C), lambda b: (0, 0)),           # LayerNorm weight
            pl.BlockSpec((T, C), lambda b: (0, 0)),           # LayerNorm bias
            pl.BlockSpec((C, G2), lambda b: (0, 0)),          # [wih_f^T | wih_b^T]
            pl.BlockSpec((1, G2), lambda b: (0, 0)),          # [b_f | b_b]
        ],
        out_specs=pl.BlockSpec((1, T, G2), lambda b: (b, 0, 0)),
        compiler_params=pltpu.CompilerParams(
            dimension_semantics=("parallel",),
            vmem_limit_bytes=vmem_a),
    )(x, p["ln_w"], p["ln_b"], p["wih_cat"], p["b_cat"])

    # Re-layout to time-major and split directions (cheap XLA ops, outside the kernel).
    xg_tm = jnp.transpose(xg, (1, 0, 2))                 # (T, B, 8H)
    xgf = xg_tm[:, :, :G]                                # (T, B, 4H) forward gates
    xgb = xg_tm[:, :, G:]                                # (T, B, 4H) backward gates

    # ------------- Kernel B: batch-vectorized bi-LSTM recurrence + Conv1d(k=2) -------------
    def lstm_conv_kernel(xgf_ref, xgb_ref, whhf_ref, whhb_ref, wcv_ref, cb_ref,
                         h_out_ref, y_out_ref):
        whhf = whhf_ref[...]                             # (H, 4H)
        whhb = whhb_ref[...]                             # (H, 4H)

        def cell(gx, h_prev, c_prev, whh):
            g = gx + jnp.dot(h_prev, whh, preferred_element_type=jnp.float32)  # (B, 4H)
            i_g = jax.nn.sigmoid(g[:, 0:H])
            f_g = jax.nn.sigmoid(g[:, H:2 * H])
            g_g = jnp.tanh(g[:, 2 * H:3 * H])
            o_g = jax.nn.sigmoid(g[:, 3 * H:4 * H])
            c_new = f_g * c_prev + i_g * g_g
            h_new = o_g * jnp.tanh(c_new)
            return h_new, c_new

        def body(s, carry):
            h_f, c_f, h_b, c_b = carry
            tb = T - 1 - s
            h_f, c_f = cell(xgf_ref[s], h_f, c_f, whhf)      # forward chain, (B, H) state
            h_b, c_b = cell(xgb_ref[tb], h_b, c_b, whhb)     # backward chain, (B, H) state
            # h stored time-major: row index t*B + b, features [fwd | bwd]
            h_out_ref[pl.ds(s * B, B), 0:H] = h_f.astype(h_out_ref.dtype)
            h_out_ref[pl.ds(tb * B, B), H:C] = h_b.astype(h_out_ref.dtype)
            return (h_f, c_f, h_b, c_b)

        zero = jnp.zeros((B, H), jnp.float32)
        jax.lax.fori_loop(0, T, body, (zero, zero, zero, zero), unroll=2)

        # Conv1d(kernel=2): one big matmul over all T*B rows, then a B-row shift + add.
        h_all = h_out_ref[...].astype(jnp.float32)           # (T*B, C), time-major
        z = jnp.dot(h_all, wcv_ref[...],
                    preferred_element_type=jnp.float32)      # (T*B, 2C) = [h@W0^T | h@W1^T]
        y = z[0:(T - 1) * B, 0:C] + z[B:T * B, C:2 * C] + cb_ref[...]
        y_out_ref[...] = y.astype(y_out_ref.dtype)

    bytes_b = 4 * (2 * T * B * G + 2 * H * G + 2 * C * C + C
                   + 3 * T * B * C + (T - 1) * B * C)
    vmem_b = int(min(max(4 * bytes_b + (8 << 20), 32 << 20), 64 << 20))

    h2d, y2d = pl.pallas_call(
        lstm_conv_kernel,
        out_shape=(jax.ShapeDtypeStruct((T * B, C), x.dtype),
                   jax.ShapeDtypeStruct(((T - 1) * B, C), x.dtype)),
        grid=(1,),
        in_specs=[
            pl.BlockSpec((T, B, G), lambda i: (0, 0, 0)),     # fwd gate pre-activations
            pl.BlockSpec((T, B, G), lambda i: (0, 0, 0)),     # bwd gate pre-activations
            pl.BlockSpec((H, G), lambda i: (0, 0)),           # W_hh fwd ^T
            pl.BlockSpec((H, G), lambda i: (0, 0)),           # W_hh bwd ^T
            pl.BlockSpec((C, 2 * C), lambda i: (0, 0)),       # [W0^T | W1^T]
            pl.BlockSpec((1, C), lambda i: (0, 0)),           # conv bias
        ],
        out_specs=(pl.BlockSpec((T * B, C), lambda i: (0, 0)),
                   pl.BlockSpec(((T - 1) * B, C), lambda i: (0, 0))),
        compiler_params=pltpu.CompilerParams(
            dimension_semantics=("arbitrary",),
            vmem_limit_bytes=vmem_b),
    )(xgf, xgb, p["whh_fT"], p["whh_bT"], p["wconv_cat"], p["conv_b"])

    # Back to batch-major layouts in the wrapper.
    h = jnp.transpose(h2d.reshape(T, B, C), (1, 0, 2))        # (B, T, C)
    y = jnp.transpose(y2d.reshape(T - 1, B, C), (1, 0, 2))    # (B, T-1, C)
    return h, y


def pyramid_forward(x, layer_params):
    """PyramidLayer.forward: feed x through the stack, collect every layer's h."""
    hs = []
    x_layer = x
    for p in layer_params:
        h_layer, x_layer = decoding_layer(x_layer, p)
        hs.append(h_layer)
    return hs


def init_params(key, total_layers, seq_length, hidden_size):
    """Deterministic parameter init matching the PyTorch module's shapes."""
    H = hidden_size
    C = 2 * H
    G = 4 * H
    layers = []
    for i in range(total_layers):
        T = seq_length - i
        keys = jax.random.split(jax.random.fold_in(key, i), 10)

        def u(kk, shape, bound):
            return jax.random.uniform(kk, shape, jnp.float32, -bound, bound)

        k = 1.0 / float(np.sqrt(H))                 # PyTorch LSTM init bound
        wih_f = u(keys[0], (G, C), k)
        whh_f = u(keys[1], (G, H), k)
        b_f = u(keys[2], (G,), k) + u(keys[3], (G,), k)   # b_ih + b_hh folded
        wih_b = u(keys[4], (G, C), k)
        whh_b = u(keys[5], (G, H), k)
        b_b = u(keys[6], (G,), k) + u(keys[7], (G,), k)

        kc = 1.0 / float(np.sqrt(C * 2))            # Conv1d init bound
        conv_w = u(keys[8], (C, C, 2), kc)          # (out, in, kernel)
        conv_b = u(keys[9], (C,), kc)

        layers.append(dict(
            ln_w=jnp.ones((T, C), jnp.float32),
            ln_b=jnp.zeros((T, C), jnp.float32),
            # unfused forms (used by the pure-JAX reference)
            wih_fT=wih_f.T, whh_fT=whh_f.T, b_f=b_f[None, :],
            wih_bT=wih_b.T, whh_bT=whh_b.T, b_b=b_b[None, :],
            w0T=conv_w[:, :, 0].T, w1T=conv_w[:, :, 1].T, conv_b=conv_b[None, :],
            # fused forms consumed by the kernels
            wih_cat=jnp.concatenate([wih_f.T, wih_b.T], axis=1),            # (C, 8H)
            b_cat=jnp.concatenate([b_f[None, :], b_b[None, :]], axis=1),    # (1, 8H)
            wconv_cat=jnp.concatenate([conv_w[:, :, 0].T, conv_w[:, :, 1].T],
                                      axis=1),                              # (C, 2C)
        ))
    return layers


# ---------------- pure-JAX reference (for correctness check only) ----------------
def _ref_decoding(x, p):
    B, T, C = x.shape
    H = C // 2
    mean = jnp.mean(x, axis=(1, 2), keepdims=True)
    var = jnp.mean((x - mean) ** 2, axis=(1, 2), keepdims=True)
    xn = (x - mean) / jnp.sqrt(var + 1e-5) * p["ln_w"][None] + p["ln_b"][None]

    def run(wihT, whhT, b, reverse):
        xg = jnp.einsum("btc,cg->btg", xn, wihT) + b
        h = jnp.zeros((B, H), jnp.float32)
        c = jnp.zeros((B, H), jnp.float32)
        hs = [None] * T
        order = range(T - 1, -1, -1) if reverse else range(T)
        for t in order:
            g = xg[:, t, :] + h @ whhT
            i_ = jax.nn.sigmoid(g[:, :H])
            f_ = jax.nn.sigmoid(g[:, H:2 * H])
            gg = jnp.tanh(g[:, 2 * H:3 * H])
            o_ = jax.nn.sigmoid(g[:, 3 * H:])
            c = f_ * c + i_ * gg
            h = o_ * jnp.tanh(c)
            hs[t] = h
        return jnp.stack(hs, axis=1)

    hf = run(p["wih_fT"], p["whh_fT"], p["b_f"], False)
    hb = run(p["wih_bT"], p["whh_bT"], p["b_b"], True)
    hout = jnp.concatenate([hf, hb], axis=-1)
    y = hout[:, :T - 1] @ p["w0T"] + hout[:, 1:] @ p["w1T"] + p["conv_b"]
    return hout, y


if __name__ == "__main__":
    B, SEQ, HID, LAYERS = 2, 8, 4, 3          # small shapes consistent with the module
    key = jax.random.PRNGKey(0)
    kx, kp = jax.random.split(key)
    x = jax.random.normal(kx, (B, SEQ, 2 * HID), jnp.float32)
    params = init_params(kp, LAYERS, SEQ, HID)

    hs = pyramid_forward(x, params)
    hs = [jax.block_until_ready(h) for h in hs]

    # sanity check against pure-JAX reference of the same math
    x_ref = x
    for i, p in enumerate(params):
        h_ref, x_ref = _ref_decoding(x_ref, p)
        np.testing.assert_allclose(np.asarray(hs[i]), np.asarray(h_ref),
                                   rtol=5e-3, atol=5e-3)

    print("KERNEL_OK")
</pallas_src>

<mosaic_0001>
module attributes {stable_mosaic.version = 11 : i64} {
  func.func @ln_proj_kernel(%arg0: i32, %arg1: memref<1x8x8xf32, #tpu.memory_space<vmem>>, %arg2: memref<8x8xf32, #tpu.memory_space<vmem>>, %arg3: memref<8x8xf32, #tpu.memory_space<vmem>>, %arg4: memref<8x32xf32, #tpu.memory_space<vmem>>, %arg5: memref<1x32xf32, #tpu.memory_space<vmem>>, %arg6: memref<1x8x32xf32, #tpu.memory_space<vmem>>) attributes {dimension_semantics = [#tpu.dimension_semantics<parallel>], iteration_bounds = array<i64: 2>, scalar_prefetch = 0 : i64, scratch_operands = 0 : i64, tpu.core_type = #tpu.core_type<tc>, window_params = [{transform_indices = @transform_0, window_bounds = array<i64: 1, 8, 8>}, {pipeline_mode = #tpu.pipeline_mode<synchronous>, transform_indices = @transform_1, window_bounds = array<i64: 8, 8>}, {pipeline_mode = #tpu.pipeline_mode<synchronous>, transform_indices = @transform_2, window_bounds = array<i64: 8, 8>}, {pipeline_mode = #tpu.pipeline_mode<synchronous>, transform_indices = @transform_3, window_bounds = array<i64: 8, 32>}, {pipeline_mode = #tpu.pipeline_mode<synchronous>, transform_indices = @transform_4, window_bounds = array<i64: 1, 32>}, {transform_indices = @transform_5, window_bounds = array<i64: 1, 8, 32>}]} {
    %c0 = arith.constant 0 : index
    %c0_0 = arith.constant 0 : index
    %c0_1 = arith.constant 0 : index
    %0 = vector.load %arg1[%c0, %c0_0, %c0_1] : memref<1x8x8xf32, #tpu.memory_space<vmem>>, vector<1x8x8xf32>
    %1 = vector.shape_cast %0 : vector<1x8x8xf32> to vector<8x8xf32>
    %2 = vector.shape_cast %1 : vector<8x8xf32> to vector<1x8x8xf32>
    %cst = arith.constant dense<0.000000e+00> : vector<1xf32>
    %3 = vector.multi_reduction <add>, %2, %cst [1, 2] : vector<1x8x8xf32> to vector<1xf32>
    %4 = vector.shape_cast %3 : vector<1xf32> to vector<1x1x1xf32>
    %5 = vector.extract %4[0, 0, 0] : f32 from vector<1x1x1xf32>
    %cst_2 = arith.constant 6.400000e+01 : f32
    %6 = arith.divf %5, %cst_2 : f32
    %7 = vector.broadcast %6 : f32 to vector<8x8xf32>
    %8 = arith.subf %1, %7 : vector<8x8xf32>
    %9 = arith.mulf %8, %8 : vector<8x8xf32>
    %10 = vector.shape_cast %9 : vector<8x8xf32> to vector<1x8x8xf32>
    %cst_3 = arith.constant dense<0.000000e+00> : vector<1xf32>
    %11 = vector.multi_reduction <add>, %10, %cst_3 [1, 2] : vector<1x8x8xf32> to vector<1xf32>
    %12 = vector.shape_cast %11 : vector<1xf32> to vector<1x1x1xf32>
    %13 = vector.extract %12[0, 0, 0] : f32 from vector<1x1x1xf32>
    %cst_4 = arith.constant 6.400000e+01 : f32
    %14 = arith.divf %13, %cst_4 : f32
    %15 = vector.broadcast %6 : f32 to vector<8x8xf32>
    %16 = arith.subf %1, %15 : vector<8x8xf32>
    %cst_5 = arith.constant 9.99999974E-6 : f32
    %17 = arith.addf %14, %cst_5 : f32
    %18 = math.rsqrt %17 : f32
    %19 = vector.broadcast %18 : f32 to vector<8x8xf32>
    %20 = arith.mulf %16, %19 : vector<8x8xf32>
    %c0_6 = arith.constant 0 : index
    %c0_7 = arith.constant 0 : index
    %21 = vector.load %arg2[%c0_6, %c0_7] : memref<8x8xf32, #tpu.memory_space<vmem>>, vector<8x8xf32>
    %22 = arith.mulf %20, %21 : vector<8x8xf32>
    %c0_8 = arith.constant 0 : index
    %c0_9 = arith.constant 0 : index
    %23 = vector.load %arg3[%c0_8, %c0_9] : memref<8x8xf32, #tpu.memory_space<vmem>>, vector<8x8xf32>
    %24 = arith.addf %22, %23 : vector<8x8xf32>
    %c0_10 = arith.constant 0 : index
    %c0_11 = arith.constant 0 : index
    %25 = vector.load %arg4[%c0_10, %c0_11] : memref<8x32xf32, #tpu.memory_space<vmem>>, vector<8x32xf32>
    %cst_12 = arith.constant dense<0.000000e+00> : vector<8x32xf32>
    %26 = tpu.matmul %24, %25, %cst_12 {dimension_numbers = #tpu.dot_dimension_numbers<[1], [0], [0], [1], [0, 0, 1, 1], [], []>} : vector<8x8xf32>, vector<8x32xf32>, vector<8x32xf32> -> vector<8x32xf32>
    %c0_13 = arith.constant 0 : index
    %c0_14 = arith.constant 0 : index
    %27 = vector.load %arg5[%c0_13, %c0_14] : memref<1x32xf32, #tpu.memory_space<vmem>>, vector<1x32xf32>
    %28 = vector.broadcast %27 : vector<1x32xf32> to vector<8x32xf32>
    %29 = arith.addf %26, %28 : vector<8x32xf32>
    %c0_15 = arith.constant 0 : index
    %c0_16 = arith.constant 0 : index
    %c0_17 = arith.constant 0 : index
    %30 = vector.load %arg6[%c0_15, %c0_16, %c0_17] : memref<1x8x32xf32, #tpu.memory_space<vmem>>, vector<1x8x32xf32>
    %31 = vector.shape_cast %30 : vector<1x8x32xf32> to vector<8x32xf32>
    %32 = vector.shape_cast %29 : vector<8x32xf32> to vector<1x8x32xf32>
    tpu.vector_store %arg6[%c0_15, %c0_16, %c0_17], %32 {strides = array<i32>} : memref<1x8x32xf32, #tpu.memory_space<vmem>>, vector<1x8x32xf32>,
    return
  }
  func.func @transform_0(%arg0: i32) -> (i32, i32, i32) {
    %c0_i32 = arith.constant 0 : i32
    %c0_i32_0 = arith.constant 0 : i32
    %c0_i32_1 = arith.constant 0 : i32
    return %arg0, %c0_i32, %c0_i32_0 : i32, i32, i32
  }
  func.func @transform_1(%arg0: i32) -> (i32, i32) {
    %c0_i32 = arith.constant 0 : i32
    %c0_i32_0 = arith.constant 0 : i32
    %c0_i32_1 = arith.constant 0 : i32
    return %c0_i32, %c0_i32_0 : i32, i32
  }
  func.func @transform_2(%arg0: i32) -> (i32, i32) {
    %c0_i32 = arith.constant 0 : i32
    %c0_i32_0 = arith.constant 0 : i32
    %c0_i32_1 = arith.constant 0 : i32
    return %c0_i32, %c0_i32_0 : i32, i32
  }
  func.func @transform_3(%arg0: i32) -> (i32, i32) {
    %c0_i32 = arith.constant 0 : i32
    %c0_i32_0 = arith.constant 0 : i32
    %c0_i32_1 = arith.constant 0 : i32
    return %c0_i32, %c0_i32_0 : i32, i32
  }
  func.func @transform_4(%arg0: i32) -> (i32, i32) {
    %c0_i32 = arith.constant 0 : i32
    %c0_i32_0 = arith.constant 0 : i32
    %c0_i32_1 = arith.constant 0 : i32
    return %c0_i32, %c0_i32_0 : i32, i32
  }
  func.func @transform_5(%arg0: i32) -> (i32, i32, i32) {
    %c0_i32 = arith.constant 0 : i32
    %c0_i32_0 = arith.constant 0 : i32
    %c0_i32_1 = arith.constant 0 : i32
    return %arg0, %c0_i32, %c0_i32_0 : i32, i32, i32
  }
}

</mosaic_0001>

<llo_original>
// kernel: tpu_custom_call.1
$region0: #{tpu_custom_call.1}
  #allocation0 [shape = 'u32[]', space=smem, size = 0x4, offset = 0x4, fixed_abs, tag = 'smem constant byte address 0x4 - core index']
  #allocation1 [shape = 'u32[144,128]{1,0:T(1,128)}', space=vmem, size = 0x12000, scoped, tag = 'internal scratch']
  %s0 = inlined_call_operand.hbm [shape: f32[2,8,8], index: 0, kind: input, shape index: {}]
  %s1 = inlined_call_operand.hbm [shape: f32[8,8], index: 1, kind: input, shape index: {}]
  %s2 = inlined_call_operand.hbm [shape: f32[8,8], index: 2, kind: input, shape index: {}]
  %s3 = inlined_call_operand.vmem [shape: f32[8,32], index: 3, kind: input, shape index: {}]
  %s4 = inlined_call_operand.vmem [shape: f32[1,32], index: 4, kind: input, shape index: {}]
  %s5 = inlined_call_operand.hbm [shape: f32[2,8,32], index: 5, kind: output, shape index: {}]
  %s6 = sld [smem:[#allocation0]]
  $region65: #{tpu_custom_call.1} parent=0
    _
  %s8 = ssub.s32 1, %s6
  %s9 = scalar_select 0, %s8, %s6
  $region1: #{tpu_custom_call.1} parent=0
    #allocation2 [shape = 'u8[8192]{0}', space=vmem, size = 0x2000, scoped, tag = 'input window, operand 0']
    #allocation3 [shape = 's32[2]{0}', space=sflag, size = 0x8, scoped, tag = 'scoped memory for tpu_custom_call.1']
    #allocation4 [shape = 's32[2]{0}', space=sflag, size = 0x8, scoped, tag = 'scoped memory for tpu_custom_call.1']
    #allocation5 [shape = 'u8[4096]{0}', space=vmem, size = 0x1000, scoped, tag = 'input window, operand 1, single buffered']
    #allocation6 [shape = 's32[1]{0}', space=sflag, size = 0x4, scoped, tag = 'scoped memory for tpu_custom_call.1']
    #allocation7 [shape = 'u8[4096]{0}', space=vmem, size = 0x1000, scoped, tag = 'input window, operand 2, single buffered']
    #allocation8 [shape = 'u8[8192]{0}', space=vmem, size = 0x2000, scoped, tag = 'output window, operand 0']
    %10 = vsyncpa [#allocation3], 0
    %s11 = scalar_lea.sflag [#allocation3], 1
    %12 = vsyncpa %s11, 0
    %13 = vsyncpa [#allocation6], 0
    %14 = vsyncpa [#allocation4], 0
    %s15 = scalar_lea.sflag [#allocation4], 1
    %16 = vsyncpa %s15, 0
    loop: start=0, step=1, limit=4
    $region2: #{tpu_custom_call.1} parent=1 // loop_pre_header
      _
    $region3: #{tpu_custom_call.1} parent=1 // loop_header
      %s18 = sphi 0, %s22
      %p19 = scmp.ge.s32.totalorder %s18, 4
      %s28 = sphi 0, %s30
      %s31 = sphi 0, %s28
      %s32 = sphi 0, %s31
      %s48 = sphi 0, %s32
      %s52 = sphi 0, %s52
      %s54 = sphi 0, %s52
      %s55 = sphi 0, %s54
      %s69 = sphi 0, %s55
      %s73 = sphi 0, %s73
      %s75 = sphi 0, %s73
      %s76 = sphi 0, %s75
      %s90 = sphi 0, %s76
      %s94 = sphi 0, %s94
      %s96 = sphi 0, %s94
      %s97 = sphi 0, %s96
      %s111 = sphi 0, %s97
      %s115 = sphi 0, %s115
      %s117 = sphi 0, %s115
      %s118 = sphi 0, %s117
      %s132 = sphi 0, %s118
      %s138 = sphi 0, %s140
      %s141 = sphi 0, %s138
      %s142 = sphi 0, %s141
      %s158 = sphi 0, %s142
    $region4: #{tpu_custom_call.1} parent=1 // loop_header_branch
      %21 = sbr.rel (%p19) target = $region8
    $region5: #{tpu_custom_call.1} parent=1 // loop_body
      %s23 = ssub.s32 %s18, 1
      %s24 = ssub.s32 %s18, 2
      %s25 = sadd.s32 %s18, 1
      %s26 = ssub.s32 %s18, %s25
      %p27 = scmp.eq.s32.totalorder %s26, 0
      %s29 = sadd.s32 %s28, 1
      %s30 = scalar_select %p27, %s28, %s29
      %p33 = pneg %p27
      %p34 = scmp.eq.s32.totalorder %s18, 1
      %p35 = por %p33, %p34
      %p36 = scmp.ne.s32.totalorder %s28, %s31
      %p37 = scmp.eq.s32.totalorder %s18, 0
      %p38 = por %p36, %p37
      %p39 = scmp.ne.s32.totalorder %s28, %s31
      %p40 = scmp.eq.s32.totalorder %s23, 1
      %p41 = por %p39, %p40
      %p42 = scmp.ne.s32.totalorder %s31, %s32
      %p43 = scmp.eq.s32.totalorder %s23, 0
      %p44 = por %p42, %p43
      %p45 = scmp.ne.s32.totalorder %s31, %s32
      %p46 = scmp.eq.s32.totalorder %s24, 1
      %p47 = por %p45, %p46
      %p49 = scmp.ne.s32.totalorder %s32, %s48
      %p50 = scmp.eq.s32.totalorder %s24, 0
      %p51 = por %p49, %p50
      %s53 = sadd.s32 %s52, 1
      %p56 = scmp.eq.s32.totalorder %s18, 1
      %p57 = scmp.ne.s32.totalorder %s52, %s54
      %p58 = scmp.eq.s32.totalorder %s18, 0
      %p59 = por %p57, %p58
      %p60 = scmp.ne.s32.totalorder %s52, %s54
      %p61 = scmp.eq.s32.totalorder %s23, 1
      %p62 = por %p60, %p61
      %p63 = scmp.ne.s32.totalorder %s54, %s55
      %p64 = scmp.eq.s32.totalorder %s23, 0
      %p65 = por %p63, %p64
      %p66 = scmp.ne.s32.totalorder %s54, %s55
      %p67 = scmp.eq.s32.totalorder %s24, 1
      %p68 = por %p66, %p67
      %p70 = scmp.ne.s32.totalorder %s55, %s69
      %p71 = scmp.eq.s32.totalorder %s24, 0
      %p72 = por %p70, %p71
      %s74 = sadd.s32 %s73, 1
      %p77 = scmp.eq.s32.totalorder %s18, 1
      %p78 = scmp.ne.s32.totalorder %s73, %s75
      %p79 = scmp.eq.s32.totalorder %s18, 0
      %p80 = por %p78, %p79
      %p81 = scmp.ne.s32.totalorder %s73, %s75
      %p82 = scmp.eq.s32.totalorder %s23, 1
      %p83 = por %p81, %p82
      %p84 = scmp.ne.s32.totalorder %s75, %s76
      %p85 = scmp.eq.s32.totalorder %s23, 0
      %p86 = por %p84, %p85
      %p87 = scmp.ne.s32.totalorder %s75, %s76
      %p88 = scmp.eq.s32.totalorder %s24, 1
      %p89 = por %p87, %p88
      %p91 = scmp.ne.s32.totalorder %s76, %s90
      %p92 = scmp.eq.s32.totalorder %s24, 0
      %p93 = por %p91, %p92
      %s95 = sadd.s32 %s94, 1
      %p98 = scmp.eq.s32.totalorder %s18, 1
      %p99 = scmp.ne.s32.totalorder %s94, %s96
      %p100 = scmp.eq.s32.totalorder %s18, 0
      %p101 = por %p99, %p100
      %p102 = scmp.ne.s32.totalorder %s94, %s96
      %p103 = scmp.eq.s32.totalorder %s23, 1
      %p104 = por %p102, %p103
      %p105 = scmp.ne.s32.totalorder %s96, %s97
      %p106 = scmp.eq.s32.totalorder %s23, 0
      %p107 = por %p105, %p106
      %p108 = scmp.ne.s32.totalorder %s96, %s97
      %p109 = scmp.eq.s32.totalorder %s24, 1
      %p110 = por %p108, %p109
      %p112 = scmp.ne.s32.totalorder %s97, %s111
      %p113 = scmp.eq.s32.totalorder %s24, 0
      %p114 = por %p112, %p113
      %s116 = sadd.s32 %s115, 1
      %p119 = scmp.eq.s32.totalorder %s18, 1
      %p120 = scmp.ne.s32.totalorder %s115, %s117
      %p121 = scmp.eq.s32.totalorder %s18, 0
      %p122 = por %p120, %p121
      %p123 = scmp.ne.s32.totalorder %s115, %s117
      %p124 = scmp.eq.s32.totalorder %s23, 1
      %p125 = por %p123, %p124
      %p126 = scmp.ne.s32.totalorder %s117, %s118
      %p127 = scmp.eq.s32.totalorder %s23, 0
      %p128 = por %p126, %p127
      %p129 = scmp.ne.s32.totalorder %s117, %s118
      %p130 = scmp.eq.s32.totalorder %s24, 1
      %p131 = por %p129, %p130
      %p133 = scmp.ne.s32.totalorder %s118, %s132
      %p134 = scmp.eq.s32.totalorder %s24, 0
      %p135 = por %p133, %p134
      %s136 = ssub.s32 %s18, %s25
      %p137 = scmp.eq.s32.totalorder %s136, 0
      %s139 = sadd.s32 %s138, 1
      %s140 = scalar_select %p137, %s138, %s139
      %p143 = pneg %p137
      %p144 = scmp.eq.s32.totalorder %s18, 1
      %p145 = por %p143, %p144
      %p146 = scmp.ne.s32.totalorder %s138, %s141
      %p147 = scmp.eq.s32.totalorder %s18, 0
      %p148 = por %p146, %p147
      %p149 = scmp.ne.s32.totalorder %s138, %s141
      %p150 = scmp.eq.s32.totalorder %s23, 1
      %p151 = por %p149, %p150
      %p152 = scmp.ne.s32.totalorder %s141, %s142
      %p153 = scmp.eq.s32.totalorder %s23, 0
      %p154 = por %p152, %p153
      %p155 = scmp.ne.s32.totalorder %s141, %s142
      %p156 = scmp.eq.s32.totalorder %s24, 1
      %p157 = por %p155, %p156
      %p159 = scmp.ne.s32.totalorder %s142, %s158
      %p160 = scmp.eq.s32.totalorder %s24, 0
      %p161 = por %p159, %p160
      %p162 = scmp.le.s32.totalorder 1, %s18
      %p163 = scmp.lt.s32.totalorder %s18, 3
      %p164 = pnand %p162, %p163
      %p165 = pneg %p164
      // Predicated region
      $region9: #{tpu_custom_call.1} parent=5 // pred_check
        _
      $region10: #{tpu_custom_call.1} parent=5 // pred_check_branch
        %167 = sbr.rel (%p164) target = $region12
      $region11: #{tpu_custom_call.1} parent=5 // pred_region
        %s168 = ssub.s32 %s18, 1
        // Predicated region
        $region13: #{tpu_custom_call.1} parent=11 // pred_check
          %p169 = pneg %p65
        $region14: #{tpu_custom_call.1} parent=11 // pred_check_branch
          %171 = sbr.rel (%p169) target = $region16
        $region15: #{tpu_custom_call.1} parent=11 // pred_region
          %s173 = ssub.s32 128, 128
          %174 = vsyncadd [#allocation6], %s173
          %s176 = sshll.u32 [#allocation5], 4
          %s177 = int_to_ptr.vmem [resolvable:$true] %s176
          %179 = dma.hbm_to_vmem [thread:$0]  %s1, 128, %s177, [#allocation6]
        $region16: #{tpu_custom_call.1} parent=11 // pred_fallthru
          _
        // Predicated region
        $region17: #{tpu_custom_call.1} parent=11 // pred_check
          %p180 = pneg %p86
        $region18: #{tpu_custom_call.1} parent=11 // pred_check_branch
          %182 = sbr.rel (%p180) target = $region20
        $region19: #{tpu_custom_call.1} parent=11 // pred_region
          %s184 = ssub.s32 128, 128
          %185 = vsyncadd [#allocation6], %s184
          %s187 = sshll.u32 [#allocation7], 4
          %s188 = int_to_ptr.vmem [resolvable:$true] %s187
          %190 = dma.hbm_to_vmem [thread:$0]  %s2, 128, %s188, [#allocation6]
        $region20: #{tpu_custom_call.1} parent=11 // pred_fallthru
          _
        // Predicated region
        $region21: #{tpu_custom_call.1} parent=11 // pred_check
          %p191 = pneg %p107
        $region22: #{tpu_custom_call.1} parent=11 // pred_check_branch
          %193 = sbr.rel (%p191) target = $region24
        $region23: #{tpu_custom_call.1} parent=11 // pred_region
          _
        $region24: #{tpu_custom_call.1} parent=11 // pred_fallthru
          _
        // Predicated region
        $region25: #{tpu_custom_call.1} parent=11 // pred_check
          %p194 = pneg %p128
        $region26: #{tpu_custom_call.1} parent=11 // pred_check_branch
          %196 = sbr.rel (%p194) target = $region28
        $region27: #{tpu_custom_call.1} parent=11 // pred_region
          _
        $region28: #{tpu_custom_call.1} parent=11 // pred_fallthru
          _
      $region12: #{tpu_custom_call.1} parent=5 // pred_fallthru
        _
      %p197 = scmp.lt.s32.totalorder %s18, 2
      // Predicated region
      $region29: #{tpu_custom_call.1} parent=5 // pred_check
        %p198 = pneg %p197
      $region30: #{tpu_custom_call.1} parent=5 // pred_check_branch
        %200 = sbr.rel (%p198) target = $region32
      $region31: #{tpu_custom_call.1} parent=5 // pred_region
        // Predicated region
        $region33: #{tpu_custom_call.1} parent=31 // pred_check
          %p201 = pneg %p38
        $region34: #{tpu_custom_call.1} parent=31 // pred_check_branch
          %203 = sbr.rel (%p201) target = $region36
        $region35: #{tpu_custom_call.1} parent=31 // pred_region
          %s204 = sand.u32 %s28, 1
          %s205 = scalar_lea.sflag [#allocation3], %s204
          %s206 = sand.u32 %s28, 1
          %s207 = smul.addr %s206, 8
          %s208 = scalar_lea.vmem [#allocation2], %s207
          %s210 = ssub.s32 128, 128
          %211 = vsyncadd %s205, %s210
          %s212 = smul.addr %s18, 128
          %s213 = scalar_lea.hbm %s0, %s212
          %s215 = sshll.u32 %s208, 4
          %s216 = int_to_ptr.vmem [resolvable:$true] %s215
          %218 = dma.hbm_to_vmem [thread:$0]  %s213, 128, %s216, %s205
        $region36: #{tpu_custom_call.1} parent=31 // pred_fallthru
          _
      $region32: #{tpu_custom_call.1} parent=5 // pred_fallthru
        _
      %p219 = scmp.le.s32.totalorder 1, %s18
      %p220 = scmp.lt.s32.totalorder %s18, 3
      %p221 = pnand %p219, %p220
      %p222 = pneg %p221
      // Predicated region
      $region37: #{tpu_custom_call.1} parent=5 // pred_check
        _
      $region38: #{tpu_custom_call.1} parent=5 // pred_check_branch
        %224 = sbr.rel (%p221) target = $region40
      $region39: #{tpu_custom_call.1} parent=5 // pred_region
        %s225 = ssub.s32 %s18, 1
        %s226 = sand.u32 %s31, 1
        %s227 = scalar_lea.sflag [#allocation3], %s226
        %s228 = sand.u32 %s31, 1
        %s229 = smul.addr %s228, 8
        %s230 = scalar_lea.vmem [#allocation2], %s229
        // Predicated region
        $region41: #{tpu_custom_call.1} parent=39 // pred_check
          %p231 = pneg %p44
        $region42: #{tpu_custom_call.1} parent=39 // pred_check_branch
          %233 = sbr.rel (%p231) target = $region44
        $region43: #{tpu_custom_call.1} parent=39 // pred_region
          %234 = dma.done %s227, 128
        $region44: #{tpu_custom_call.1} parent=39 // pred_fallthru
          _
        // Predicated region
        $region45: #{tpu_custom_call.1} parent=39 // pred_check
          %p235 = pneg %p65
        $region46: #{tpu_custom_call.1} parent=39 // pred_check_branch
          %237 = sbr.rel (%p235) target = $region48
        $region47: #{tpu_custom_call.1} parent=39 // pred_region
          %238 = dma.done [#allocation6], 128
        $region48: #{tpu_custom_call.1} parent=39 // pred_fallthru
          _
        // Predicated region
        $region49: #{tpu_custom_call.1} parent=39 // pred_check
          %p239 = pneg %p86
        $region50: #{tpu_custom_call.1} parent=39 // pred_check_branch
          %241 = sbr.rel (%p239) target = $region52
        $region51: #{tpu_custom_call.1} parent=39 // pred_region
          %242 = dma.done [#allocation6], 128
        $region52: #{tpu_custom_call.1} parent=39 // pred_fallthru
          _
        %s243 = sand.u32 %s31, 1
        %s244 = scalar_lea.sflag [#allocation3], %s243
        %s245 = sand.u32 %s31, 1
        %s246 = smul.addr %s245, 8
        %s247 = scalar_lea.vmem [#allocation2], %s246
        %p248 = pneg %p44
        %p249 = pneg %p41
        %p250 = pneg %p65
        %p251 = pneg %p62
        %p252 = pneg %p86
        %p253 = pneg %p83
        %p254 = pneg %p107
        %p255 = pneg %p104
        %p256 = pneg %p128
        %p257 = pneg %p125
        %p258 = pneg %p154
        %p259 = pneg %p151
        %s260 = sand.u32 %s141, 1
        %s261 = scalar_lea.sflag [#allocation4], %s260
        %s262 = sand.u32 %s141, 1
        %s263 = smul.addr %s262, 8
        %s264 = scalar_lea.vmem [#allocation8], %s263
        %v265 = vld [vmem:[%s230] sm:$0xff]
        %vm266 = vcmask 64512
        %v267 = vsel %vm266, %v265, 0.0
        %268 = vadd.xlane.f32.xlu0 %v267
        %v269 = vpop.xlane.xlu0 %268
        %v270 = vrot.slane %v269, 4
        %v271 = vadd.f32 %v269, %v270
        %v272 = vrot.slane %v271, 2
        %v273 = vadd.f32 %v271, %v272
        %v274 = vrot.slane %v273, 1
        %v275 = vadd.f32 %v273, %v274
        %s276 = vtos %v275
        %v277 = vrcp.pop 64.0
        %s278 = vtos %v277
        %s279 = smul.f32 %s276, %s278
        %v280 = vstv %s279
        %v281 = vsub.f32 %v265, %v280
        %v282 = vmul.f32 %v281, %v281
        %v283 = vsel %vm266, %v282, 0.0
        %284 = vadd.xlane.f32.xlu0 %v283
        %v285 = vpop.xlane.xlu0 %284
        %v286 = vrot.slane %v285, 4
        %v287 = vadd.f32 %v285, %v286
        %v288 = vrot.slane %v287, 2
        %v289 = vadd.f32 %v287, %v288
        %v290 = vrot.slane %v289, 1
        %v291 = vadd.f32 %v289, %v290
        %s292 = vtos %v291
        %v293 = vrcp.pop 64.0
        %s294 = vtos %v293
        %s295 = smul.f32 %s292, %s294
        %s296 = sadd.f32 %s295, 1e-05
        %v297 = vstv %s296
        %v298 = vrsqrt.pop %v297
        %s299 = vtos %v298
        %v300 = vstv %s299
        %v301 = vmul.f32 %v281, %v300
        %v302 = vld [vmem:[#allocation5] sm:$0xff]
        %v303 = vmul.f32 %v301, %v302
        %v304 = vld [vmem:[#allocation7] sm:$0xff]
        %v305 = vadd.f32 %v303, %v304
        %v306 = vld [vmem:[%s3] sm:$0xff]
        %v307 = vld [vmem:[%s4] sm:$0x1]
        %v309 = vlaneseq
        %v310 = vshrl.u32 %v309, 7
        %v311 = vsub.s32 0, %v310
        %v312 = vrot.slane %v307, %v311
        %v315 = vsel %vm266, %v305, 0
        %317 = vmatprep.subr.mxu0 0.0
        %318 = vmatpush1.msra.mxu0 %v306
        %319 = vmatprep.subr.mxu0 0.0
        %320 = vmatpush1.msra.mxu0 0.0
        %321 = vmatprep.subr.mxu0 0.0
        %322 = vmatpush1.msra.mxu0 0.0
        %323 = vmatprep.subr.mxu0 0.0
        %324 = vmatpush1.msra.mxu0 0.0
        %325 = vmatprep.subr.mxu0 0.0
        %326 = vmatpush1.msra.mxu0 0.0
        %327 = vmatprep.subr.mxu0 0.0
        %328 = vmatpush1.msra.mxu0 0.0
        %329 = vmatprep.subr.mxu0 0.0
        %330 = vmatpush1.msra.mxu0 0.0
        %331 = vmatprep.subr.mxu0 0.0
        %332 = vmatpush1.msra.mxu0 0.0
        %333 = vmatprep.subr.mxu0 0.0
        %334 = vmatpush1.msra.mxu0 0.0
        %335 = vmatprep.subr.mxu0 0.0
        %336 = vmatpush1.msra.mxu0 0.0
        %337 = vmatprep.subr.mxu0 0.0
        %338 = vmatpush1.msra.mxu0 0.0
        %339 = vmatprep.subr.mxu0 0.0
        %340 = vmatpush1.msra.mxu0 0.0
        %341 = vmatprep.subr.mxu0 0.0
        %342 = vmatpush1.msra.mxu0 0.0
        %343 = vmatprep.subr.mxu0 0.0
        %344 = vmatpush1.msra.mxu0 0.0
        %345 = vmatprep.subr.mxu0 0.0
        %346 = vmatpush1.msra.mxu0 0.0
        %347 = vmatprep.subr.mxu0 0.0
        %348 = vmatpush1.msra.mxu0 0.0
        %349 = vmatprep.subr.mxu0 0.0
        %350 = vmatpush1.msra.mxu0 0.0
        %351 = vmatprep.subr.mxu0 0.0
        %352 = vmatpush1.msra.mxu0 0.0
        %353 = vmatprep.subr.mxu0 0.0
        %354 = vmatpush1.msra.mxu0 0.0
        %355 = vmatprep.subr.mxu0 0.0
        %356 = vmatpush1.msra.mxu0 0.0
        %357 = vmatprep.subr.mxu0 0.0
        %358 = vmatpush1.msra.mxu0 0.0
        %359 = vmatprep.subr.mxu0 0.0
        %360 = vmatpush1.msra.mxu0 0.0
        %361 = vmatprep.subr.mxu0 0.0
        %362 = vmatpush1.msra.mxu0 0.0
        %363 = vmatprep.subr.mxu0 0.0
        %364 = vmatpush1.msra.mxu0 0.0
        %365 = vmatprep.subr.mxu0 0.0
        %366 = vmatpush1.msra.mxu0 0.0
        %367 = vmatprep.subr.mxu0 0.0
        %368 = vmatpush1.msra.mxu0 0.0
        %369 = vmatprep.subr.mxu0 0.0
        %370 = vmatpush1.msra.mxu0 0.0
        %371 = vmatprep.subr.mxu0 0.0
        %372 = vmatpush1.msra.mxu0 0.0
        %373 = vmatprep.subr.mxu0 0.0
        %374 = vmatpush1.msra.mxu0 0.0
        %375 = vmatprep.subr.mxu0 0.0
        %376 = vmatpush1.msra.mxu0 0.0
        %377 = vmatprep.subr.mxu0 0.0
        %378 = vmatpush1.msra.mxu0 0.0
        %379 = vmatprep.subr.mxu0 0.0
        %380 = vmatpush1.msra.mxu0 0.0
        %381 = vmatprep.mubr.f32.mxu0 0.0
        %382 = vmatmul.mubr.f32.gmra.mrb[0].mxu0 %v315
        %v383 = vpop.f32.mrb[0].mxu0
        %v384 = vadd.f32 %v312, %v383
        %v385 = vpop.f32.mrb[0].mxu0
        %386 = vdwg.mxu0
        %vm387 = vcmask 261120
        %388 = vst.msk [vmem:[%s264] sm:$0xff] %vm387, %v384
        %s389 = sand.u32 %s141, 1
        %s390 = scalar_lea.sflag [#allocation4], %s389
        %s391 = sand.u32 %s141, 1
        %s392 = smul.addr %s391, 8
        %s393 = scalar_lea.vmem [#allocation8], %s392
        // Predicated region
        $region53: #{tpu_custom_call.1} parent=39 // pred_check
          %p394 = pneg %p151
        $region54: #{tpu_custom_call.1} parent=39 // pred_check_branch
          %396 = sbr.rel (%p394) target = $region56
        $region55: #{tpu_custom_call.1} parent=39 // pred_region
          %s398 = ssub.s32 128, 128
          %399 = vsyncadd %s390, %s398
          %s400 = smul.addr %s23, 128
          %s401 = scalar_lea.hbm %s5, %s400
          %s403 = sshll.u32 %s393, 4
          %s404 = int_to_ptr.vmem [resolvable:$true] %s403
          %406 = dma.vmem_to_hbm [thread:$0]  %s404, 128, %s401, %s390
        $region56: #{tpu_custom_call.1} parent=39 // pred_fallthru
          _
      $region40: #{tpu_custom_call.1} parent=5 // pred_fallthru
        _
      %p407 = scmp.le.s32.totalorder 2, %s18
      // Predicated region
      $region57: #{tpu_custom_call.1} parent=5 // pred_check
        %p408 = pneg %p407
      $region58: #{tpu_custom_call.1} parent=5 // pred_check_branch
        %410 = sbr.rel (%p408) target = $region60
      $region59: #{tpu_custom_call.1} parent=5 // pred_region
        %s411 = ssub.s32 %s18, 2
        // Predicated region
        $region61: #{tpu_custom_call.1} parent=59 // pred_check
          %p412 = pneg %p157
        $region62: #{tpu_custom_call.1} parent=59 // pred_check_branch
          %414 = sbr.rel (%p412) target = $region64
        $region63: #{tpu_custom_call.1} parent=59 // pred_region
          %s415 = sand.u32 %s142, 1
          %s416 = scalar_lea.sflag [#allocation4], %s415
          %s417 = sand.u32 %s142, 1
          %s418 = smul.addr %s417, 8
          %s419 = scalar_lea.vmem [#allocation8], %s418
          %420 = dma.done %s416, 128
        $region64: #{tpu_custom_call.1} parent=59 // pred_fallthru
          _
      $region60: #{tpu_custom_call.1} parent=5 // pred_fallthru
        _
    $region6: #{tpu_custom_call.1} parent=1 // loop_footer
      %s22 = sadd.s32 1, %s18
    $region7: #{tpu_custom_call.1} parent=1 // loop_footer_branch
      %17 = sbr.rel target = $region3
    $region8: #{tpu_custom_call.1} parent=1 // loop_exit
      _
    %421 = vsyncpa [#allocation3], 1
    %s422 = scalar_lea.sflag [#allocation3], 1
    %423 = vsyncpa %s422, 1
    %424 = vsyncpa [#allocation6], 1
    %425 = vsyncpa [#allocation4], 1
    %s426 = scalar_lea.sflag [#allocation4], 1
    %427 = vsyncpa %s426, 1

</llo_original>
